<compile_context>
chip_gen: v6e
topology: v6e:2x2x1
jax: 0.10.0
libtpu: 0.0.40
codegen_flags: <defaults>
</compile_context>

<pallas_src>
import functools

import jax
import jax.numpy as jnp
from jax.experimental import pallas as pl
from jax.experimental.pallas import tpu as pltpu


_LANE = 128
_DEFAULT_TILE = 512  # 512x512 f32 = 1 MiB per buffer; safe for v7x's 64 MiB VMEM.


def _round_up(x, m):
    return ((x + m - 1) // m) * m


def _grid_geometry(n, tile):
    """Pad N and pick a square A-tile edge T that divides padded N."""
    tile = max(_LANE, _round_up(tile, _LANE))
    n_pad = _round_up(n, _LANE)
    if n_pad <= tile:
        return n_pad, n_pad  # single tile covers everything
    n_pad = _round_up(n, tile)
    return n_pad, tile


# ---------------------------------------------------------------------------
# Kernel 1: tiled degree pass.  Accumulates partial row sums of A into the
# (T,1) output block across the contraction axis, then finalizes to
# D = rsqrt(deg + 1) and D + 1 (folded normalization factor).
# ---------------------------------------------------------------------------
def _degree_kernel(a_ref, d_ref, dp1_ref):
    j = pl.program_id(1)

    @pl.when(j == 0)
    def _():
        d_ref[...] = jnp.zeros_like(d_ref)

    d_ref[...] += jnp.sum(a_ref[...].astype(jnp.float32), axis=-1, keepdims=True)

    @pl.when(j == pl.num_programs(1) - 1)
    def _():
        d = jax.lax.rsqrt(d_ref[...] + 1.0)
        d_ref[...] = d
        dp1_ref[...] = d + 1.0


# ---------------------------------------------------------------------------
# Kernel 2: one propagation hop.  y[i-block] = sum_j A[i,j] @ ((D+1)*Xc)[j],
# finalized with the per-output-row D scaling.  A streams as (T,T) tiles;
# Xc/D blocks are tiny.  f32 accumulation always; A (and the MXU RHS cast)
# may be bf16 to halve HBM traffic.
# ---------------------------------------------------------------------------
def _hop_kernel(*refs, normalize):
    if normalize:
        a_ref, x_ref, d_ref, dp1_ref, y_ref = refs
    else:
        a_ref, x_ref, y_ref = refs
    j = pl.program_id(1)

    @pl.when(j == 0)
    def _():
        y_ref[...] = jnp.zeros_like(y_ref)

    a = a_ref[...]
    x = x_ref[...]
    if normalize:
        # Folded normalization: D*Xc + Xc == (D + 1) * Xc  (f32 VPU math).
        x = dp1_ref[...] * x
    y_ref[...] += jnp.dot(a, x.astype(a.dtype), preferred_element_type=jnp.float32)

    @pl.when(j == pl.num_programs(1) - 1)
    def _():
        if normalize:
            y_ref[...] = d_ref[...] * y_ref[...]


# ---------------------------------------------------------------------------
# Kernel 3: deferred output projection.  H = [Xc_1 | ... | Xc_K] @ W_flat + b,
# one MXU matmul over the whole K*C_in contraction instead of K tiny ones.
# ---------------------------------------------------------------------------
def _project_kernel(s_ref, w_ref, b_ref, h_ref):
    h_ref[...] = (
        jnp.dot(s_ref[...], w_ref[...], preferred_element_type=jnp.float32)
        + b_ref[...]
    )


def tagconv_forward(A, X, weights, bias, *, normalize=True,
                    a_dtype=jnp.float32, tile=_DEFAULT_TILE):
    """JAX wrapper mirroring TAGConv.forward(A, X) with a dense adjacency."""
    if X.ndim == 1:
        X = X[:, None]
    k_hops, c_in, c_out = weights.shape
    assert X.shape[1] == c_in
    n = X.shape[0]
    assert A.shape == (n, n)

    n_pad, t = _grid_geometry(n, tile)
    n_tiles = n_pad // t

    # Zero padding: padded rows/cols of A contribute nothing and padded X rows
    # are zero, so the extra rows are inert and get sliced off at the end.
    A_p = jnp.zeros((n_pad, n_pad), a_dtype).at[:n, :n].set(A.astype(a_dtype))
    X_p = jnp.zeros((n_pad, c_in), jnp.float32).at[:n, :].set(X.astype(jnp.float32))
    w_flat = weights.astype(jnp.float32).reshape(k_hops * c_in, c_out)
    bias2d = bias.astype(jnp.float32).reshape(1, c_out)

    # Explicit scoped-VMEM budget: double-buffered A tile dominates.
    a_tile_bytes = 2 * t * t * jnp.dtype(a_dtype).itemsize
    small_bytes = 8 * t * max(c_in, c_out, k_hops * c_in) * 4 + (2 << 20)
    vmem_limit = int(min(max(2 * (a_tile_bytes + small_bytes), 32 << 20), 64 << 20))
    params_2d = pltpu.CompilerParams(
        dimension_semantics=("parallel", "arbitrary"),
        vmem_limit_bytes=vmem_limit,
    )

    a_spec = pl.BlockSpec((t, t), lambda i, j: (i, j))
    rowvec_i = pl.BlockSpec((t, 1), lambda i, j: (i, 0))
    rowvec_j = pl.BlockSpec((t, 1), lambda i, j: (j, 0))

    if normalize:
        d, dp1 = pl.pallas_call(
            _degree_kernel,
            grid=(n_tiles, n_tiles),
            in_specs=[a_spec],
            out_specs=[rowvec_i, rowvec_i],
            out_shape=[
                jax.ShapeDtypeStruct((n_pad, 1), jnp.float32),
                jax.ShapeDtypeStruct((n_pad, 1), jnp.float32),
            ],
            compiler_params=params_2d,
        )(A_p)

    hop_kernel = functools.partial(_hop_kernel, normalize=normalize)
    if normalize:
        hop_in_specs = [
            a_spec,                                        # A tile (i, j)
            pl.BlockSpec((t, c_in), lambda i, j: (j, 0)),  # Xc rows for contraction
            rowvec_i,                                      # D for output rows
            rowvec_j,                                      # D+1 for contraction rows
        ]
    else:
        hop_in_specs = [a_spec, pl.BlockSpec((t, c_in), lambda i, j: (j, 0))]

    hop_call = pl.pallas_call(
        hop_kernel,
        grid=(n_tiles, n_tiles),
        in_specs=hop_in_specs,
        out_specs=pl.BlockSpec((t, c_in), lambda i, j: (i, 0)),
        out_shape=jax.ShapeDtypeStruct((n_pad, c_in), jnp.float32),
        compiler_params=params_2d,
    )

    xc = X_p
    hops = []
    for _ in range(k_hops):
        xc = hop_call(A_p, xc, d, dp1) if normalize else hop_call(A_p, xc)
        hops.append(xc)

    # Deferred projection: single (N, K*C_in) @ (K*C_in, C_out) matmul + bias.
    slab = jnp.concatenate(hops, axis=1)
    h = pl.pallas_call(
        _project_kernel,
        grid=(n_tiles,),
        in_specs=[
            pl.BlockSpec((t, k_hops * c_in), lambda i: (i, 0)),
            pl.BlockSpec((k_hops * c_in, c_out), lambda i: (0, 0)),
            pl.BlockSpec((1, c_out), lambda i: (0, 0)),
        ],
        out_specs=pl.BlockSpec((t, c_out), lambda i: (i, 0)),
        out_shape=jax.ShapeDtypeStruct((n_pad, c_out), jnp.float32),
        compiler_params=pltpu.CompilerParams(
            dimension_semantics=("parallel",),
            vmem_limit_bytes=vmem_limit,
        ),
    )(slab, w_flat, bias2d)

    return h[:n]


def _tagconv_reference(A, X, weights, bias, *, normalize=True):
    """Pure-JAX reference mirroring the PyTorch module line-by-line."""
    if X.ndim == 1:
        X = X[:, None]
    k_hops, _, c_out = weights.shape
    Xc = X.astype(jnp.float32)
    H = jnp.zeros((X.shape[0], c_out), dtype=jnp.float32)
    if normalize:
        D = (jnp.sum(A, axis=1) + 1.0) ** (-0.5)
    for k in range(k_hops):
        if normalize:
            Xc = D[:, None] * (A @ (D[:, None] * Xc + Xc))
        else:
            Xc = A @ Xc
        H = H + Xc @ weights[k]
    return H + bias


def _check(out, ref, tol, what):
    err = float(jnp.max(jnp.abs(out - ref)) / (jnp.max(jnp.abs(ref)) + 1e-12))
    assert err < tol, f"{what}: max rel-to-max error {err} >= {tol}"


if __name__ == "__main__":
    key = jax.random.PRNGKey(0)
    k_a, k_x, k_w, k_b = jax.random.split(key, 4)

    N, C_IN, C_OUT, K = 200, 8, 16, 3

    # Synthetic sparse-ish adjacency realized densely (nonnegative weights).
    A = jnp.abs(jax.random.normal(k_a, (N, N), dtype=jnp.float32))
    A = jnp.where(A > 1.2, A, 0.0)
    X = jax.random.normal(k_x, (N, C_IN), dtype=jnp.float32)
    weights = jax.random.normal(k_w, (K, C_IN, C_OUT), dtype=jnp.float32)
    bias = jax.random.normal(k_b, (C_OUT,), dtype=jnp.float32)

    ref = _tagconv_reference(A, X, weights, bias, normalize=True)

    # 1) f32, normalized, default tile (single-tile path, N_pad <= 512).
    out = jax.block_until_ready(tagconv_forward(A, X, weights, bias, normalize=True))
    assert out.shape == (N, C_OUT)
    _check(out, ref, 1e-3, "f32 normalize=True (single tile)")

    # 2) f32, normalized, small tiles -> multi-tile grid (exercises the tiled
    #    contraction accumulate / pl.when finalize and row padding).
    out_t = jax.block_until_ready(
        tagconv_forward(A, X, weights, bias, normalize=True, tile=128))
    _check(out_t, ref, 1e-3, "f32 normalize=True (tiled grid)")

    # 3) f32, normalize=False path.
    out_nn = jax.block_until_ready(
        tagconv_forward(A, X, weights, bias, normalize=False, tile=128))
    ref_nn = _tagconv_reference(A, X, weights, bias, normalize=False)
    _check(out_nn, ref_nn, 1e-3, "f32 normalize=False")

    # 4) bf16 adjacency streaming (halves HBM bytes of the dominant operand),
    #    f32 accumulation; compared against the bf16-rounded-A reference.
    out_bf = jax.block_until_ready(
        tagconv_forward(A, X, weights, bias, normalize=True,
                        a_dtype=jnp.bfloat16, tile=128))
    A_bf = A.astype(jnp.bfloat16).astype(jnp.float32)
    ref_bf = _tagconv_reference(A_bf, X, weights, bias, normalize=True)
    _check(out_bf, ref_bf, 2e-2, "bf16-A normalize=True")

    print("KERNEL_OK")
</pallas_src>

<mosaic_0001>
module attributes {stable_mosaic.version = 11 : i64} {
  func.func @_degree_kernel(%arg0: i32, %arg1: i32, %arg2: memref<256x256xf32, #tpu.memory_space<vmem>>, %arg3: memref<256x1xf32, #tpu.memory_space<vmem>>, %arg4: memref<256x1xf32, #tpu.memory_space<vmem>>) attributes {dimension_semantics = [#tpu.dimension_semantics<parallel>, #tpu.dimension_semantics<arbitrary>], iteration_bounds = array<i64: 1, 1>, scalar_prefetch = 0 : i64, scratch_operands = 0 : i64, tpu.core_type = #tpu.core_type<tc>, window_params = [{transform_indices = @transform_0, window_bounds = array<i64: 256, 256>}, {transform_indices = @transform_1, window_bounds = array<i64: 256, 1>}, {transform_indices = @transform_2, window_bounds = array<i64: 256, 1>}]} {
    %c0_i32 = arith.constant 0 : i32
    %0 = arith.cmpi eq, %arg1, %c0_i32 : i32
    %1 = arith.extui %0 : i1 to i32
    %c0_i32_0 = arith.constant 0 : i32
    %2 = arith.cmpi ne, %1, %c0_i32_0 : i32
    scf.if %2 {
      %cst_8 = arith.constant 0.000000e+00 : f32
      %12 = vector.broadcast %cst_8 : f32 to vector<256x1xf32>
      %c0_9 = arith.constant 0 : index
      %c0_10 = arith.constant 0 : index
      %13 = vector.load %arg3[%c0_9, %c0_10] : memref<256x1xf32, #tpu.memory_space<vmem>>, vector<256x1xf32>
      tpu.vector_store %arg3[%c0_9, %c0_10], %12 {strides = array<i32>} : memref<256x1xf32, #tpu.memory_space<vmem>>, vector<256x1xf32>,
    } else {
    }
    %c0 = arith.constant 0 : index
    %c0_1 = arith.constant 0 : index
    %3 = vector.load %arg3[%c0, %c0_1] : memref<256x1xf32, #tpu.memory_space<vmem>>, vector<256x1xf32>
    %c0_2 = arith.constant 0 : index
    %c0_3 = arith.constant 0 : index
    %4 = vector.load %arg2[%c0_2, %c0_3] : memref<256x256xf32, #tpu.memory_space<vmem>>, vector<256x256xf32>
    %cst = arith.constant dense<0.000000e+00> : vector<256xf32>
    %5 = vector.multi_reduction <add>, %4, %cst [1] : vector<256x256xf32> to vector<256xf32>
    %6 = vector.shape_cast %5 : vector<256xf32> to vector<256x1xf32>
    %7 = arith.addf %3, %6 : vector<256x1xf32>
    %c0_4 = arith.constant 0 : index
    %c0_5 = arith.constant 0 : index
    %8 = vector.load %arg3[%c0_4, %c0_5] : memref<256x1xf32, #tpu.memory_space<vmem>>, vector<256x1xf32>
    tpu.vector_store %arg3[%c0_4, %c0_5], %7 {strides = array<i32>} : memref<256x1xf32, #tpu.memory_space<vmem>>, vector<256x1xf32>,
    %c0_i32_6 = arith.constant 0 : i32
    %9 = arith.cmpi eq, %arg1, %c0_i32_6 : i32
    %10 = arith.extui %9 : i1 to i32
    %c0_i32_7 = arith.constant 0 : i32
    %11 = arith.cmpi ne, %10, %c0_i32_7 : i32
    scf.if %11 {
      %c0_8 = arith.constant 0 : index
      %c0_9 = arith.constant 0 : index
      %12 = vector.load %arg3[%c0_8, %c0_9] : memref<256x1xf32, #tpu.memory_space<vmem>>, vector<256x1xf32>
      %cst_10 = arith.constant 1.000000e+00 : f32
      %13 = vector.broadcast %cst_10 : f32 to vector<256x1xf32>
      %14 = arith.addf %12, %13 : vector<256x1xf32>
      %15 = math.rsqrt %14 : vector<256x1xf32>
      %c0_11 = arith.constant 0 : index
      %c0_12 = arith.constant 0 : index
      %16 = vector.load %arg3[%c0_11, %c0_12] : memref<256x1xf32, #tpu.memory_space<vmem>>, vector<256x1xf32>
      tpu.vector_store %arg3[%c0_11, %c0_12], %15 {strides = array<i32>} : memref<256x1xf32, #tpu.memory_space<vmem>>, vector<256x1xf32>,
      %cst_13 = arith.constant 1.000000e+00 : f32
      %17 = vector.broadcast %cst_13 : f32 to vector<256x1xf32>
      %18 = arith.addf %15, %17 : vector<256x1xf32>
      %c0_14 = arith.constant 0 : index
      %c0_15 = arith.constant 0 : index
      %19 = vector.load %arg4[%c0_14, %c0_15] : memref<256x1xf32, #tpu.memory_space<vmem>>, vector<256x1xf32>
      tpu.vector_store %arg4[%c0_14, %c0_15], %18 {strides = array<i32>} : memref<256x1xf32, #tpu.memory_space<vmem>>, vector<256x1xf32>,
    } else {
    }
    return
  }
  func.func @transform_0(%arg0: i32, %arg1: i32) -> (i32, i32) {
    %c0_i32 = arith.constant 0 : i32
    return %arg0, %arg1 : i32, i32
  }
  func.func @transform_1(%arg0: i32, %arg1: i32) -> (i32, i32) {
    %c0_i32 = arith.constant 0 : i32
    %c0_i32_0 = arith.constant 0 : i32
    return %arg0, %c0_i32 : i32, i32
  }
  func.func @transform_2(%arg0: i32, %arg1: i32) -> (i32, i32) {
    %c0_i32 = arith.constant 0 : i32
    %c0_i32_0 = arith.constant 0 : i32
    return %arg0, %c0_i32 : i32, i32
  }
}

</mosaic_0001>

<llo_original>
// kernel: tpu_custom_call.1
$region0: #{tpu_custom_call.1}
  #allocation0 [shape = 'u32[]', space=smem, size = 0x4, offset = 0x4, fixed_abs, tag = 'smem constant byte address 0x4 - core index']
  #allocation1 [shape = 'u32[144,128]{1,0:T(1,128)}', space=vmem, size = 0x12000, scoped, tag = 'internal scratch']
  %s0 = inlined_call_operand.hbm [shape: f32[256,256], index: 0, kind: input, shape index: {}]
  %s1 = inlined_call_operand.vmem [shape: f32[256,1], index: 1, kind: output, shape index: {0}]
  %s2 = inlined_call_operand.vmem [shape: f32[256,1], index: 2, kind: output, shape index: {1}]
  %3 = xla_tuple %s1, %s2
  %s4 = sld [smem:[#allocation0]]
  $region34: #{tpu_custom_call.1} parent=0
    _
  %s6 = ssub.s32 1, %s4
  %s7 = scalar_select 0, %s6, %s4
  $region1: #{tpu_custom_call.1} parent=0
    #allocation2 [shape = 'u8[262144]{0}', space=vmem, size = 0x40000, scoped, tag = 'input window, operand 0, single buffered']
    #allocation3 [shape = 's32[1]{0}', space=sflag, size = 0x4, scoped, tag = 'scoped memory for tpu_custom_call.1']
    %8 = vsyncpa [#allocation3], 0
    // Predicated region
    $region2: #{tpu_custom_call.1} parent=1 // pred_check
      _
    $region3: #{tpu_custom_call.1} parent=1 // pred_check_branch
      %10 = sbr.rel (0) target = $region5
    $region4: #{tpu_custom_call.1} parent=1 // pred_region
      %s12 = ssub.s32 8192, 8192
      %13 = vsyncadd [#allocation3], %s12
      %s14 = sshll.u32 [#allocation2], 4
      %s15 = int_to_ptr.vmem [resolvable:$true] %s14
      %20 = dma.hbm_to_vmem [thread:$0]  %s0, 8192, %s15, [#allocation3], 256, 256, 16
    $region5: #{tpu_custom_call.1} parent=1 // pred_fallthru
      _
    // Predicated region
    $region6: #{tpu_custom_call.1} parent=1 // pred_check
      _
    $region7: #{tpu_custom_call.1} parent=1 // pred_check_branch
      %22 = sbr.rel (0) target = $region9
    $region8: #{tpu_custom_call.1} parent=1 // pred_region
      %23 = dma.done [#allocation3], 8192
    $region9: #{tpu_custom_call.1} parent=1 // pred_fallthru
      _
    %p24 = scmp.eq.s32.totalorder 0, 0
    // Predicated region
    $region10: #{tpu_custom_call.1} parent=1 // pred_check
      %p25 = pneg %p24
    $region11: #{tpu_custom_call.1} parent=1 // pred_check_branch
      %27 = sbr.rel (%p25) target = $region13
    $region12: #{tpu_custom_call.1} parent=1 // pred_region
      %vm28 = vcmask 7168
      %29 = vst.msk [vmem:[%s1] sm:$0xff] %vm28, 0.0
      %30 = vst.msk [vmem:[%s1 + $0x8] sm:$0xff] %vm28, 0.0
      %31 = vst.msk [vmem:[%s1 + $0x10] sm:$0xff] %vm28, 0.0
      %32 = vst.msk [vmem:[%s1 + $0x18] sm:$0xff] %vm28, 0.0
      %33 = vst.msk [vmem:[%s1 + $0x20] sm:$0xff] %vm28, 0.0
      %34 = vst.msk [vmem:[%s1 + $0x28] sm:$0xff] %vm28, 0.0
      %35 = vst.msk [vmem:[%s1 + $0x30] sm:$0xff] %vm28, 0.0
      %36 = vst.msk [vmem:[%s1 + $0x38] sm:$0xff] %vm28, 0.0
      %37 = vst.msk [vmem:[%s1 + $0x40] sm:$0xff] %vm28, 0.0
      %38 = vst.msk [vmem:[%s1 + $0x48] sm:$0xff] %vm28, 0.0
      %39 = vst.msk [vmem:[%s1 + $0x50] sm:$0xff] %vm28, 0.0
      %40 = vst.msk [vmem:[%s1 + $0x58] sm:$0xff] %vm28, 0.0
      %41 = vst.msk [vmem:[%s1 + $0x60] sm:$0xff] %vm28, 0.0
      %42 = vst.msk [vmem:[%s1 + $0x68] sm:$0xff] %vm28, 0.0
      %43 = vst.msk [vmem:[%s1 + $0x70] sm:$0xff] %vm28, 0.0
      %44 = vst.msk [vmem:[%s1 + $0x78] sm:$0xff] %vm28, 0.0
      %45 = vst.msk [vmem:[%s1 + $0x80] sm:$0xff] %vm28, 0.0
      %46 = vst.msk [vmem:[%s1 + $0x88] sm:$0xff] %vm28, 0.0
      %47 = vst.msk [vmem:[%s1 + $0x90] sm:$0xff] %vm28, 0.0
      %48 = vst.msk [vmem:[%s1 + $0x98] sm:$0xff] %vm28, 0.0
      %49 = vst.msk [vmem:[%s1 + $0xa0] sm:$0xff] %vm28, 0.0
      %50 = vst.msk [vmem:[%s1 + $0xa8] sm:$0xff] %vm28, 0.0
      %51 = vst.msk [vmem:[%s1 + $0xb0] sm:$0xff] %vm28, 0.0
      %52 = vst.msk [vmem:[%s1 + $0xb8] sm:$0xff] %vm28, 0.0
      %53 = vst.msk [vmem:[%s1 + $0xc0] sm:$0xff] %vm28, 0.0
      %54 = vst.msk [vmem:[%s1 + $0xc8] sm:$0xff] %vm28, 0.0
      %55 = vst.msk [vmem:[%s1 + $0xd0] sm:$0xff] %vm28, 0.0
      %56 = vst.msk [vmem:[%s1 + $0xd8] sm:$0xff] %vm28, 0.0
      %57 = vst.msk [vmem:[%s1 + $0xe0] sm:$0xff] %vm28, 0.0
      %58 = vst.msk [vmem:[%s1 + $0xe8] sm:$0xff] %vm28, 0.0
      %59 = vst.msk [vmem:[%s1 + $0xf0] sm:$0xff] %vm28, 0.0
      %60 = vst.msk [vmem:[%s1 + $0xf8] sm:$0xff] %vm28, 0.0
    $region13: #{tpu_custom_call.1} parent=1 // pred_fallthru
      _
    %v61 = vld [vmem:[%s1] sm:$0xff]
    %v62 = vld [vmem:[%s1 + $0x8] sm:$0xff]
    %v63 = vld [vmem:[%s1 + $0x10] sm:$0xff]
    %v64 = vld [vmem:[%s1 + $0x18] sm:$0xff]
    %v65 = vld [vmem:[%s1 + $0x20] sm:$0xff]
    %v66 = vld [vmem:[%s1 + $0x28] sm:$0xff]
    %v67 = vld [vmem:[%s1 + $0x30] sm:$0xff]
    %v68 = vld [vmem:[%s1 + $0x38] sm:$0xff]
    %v69 = vld [vmem:[%s1 + $0x40] sm:$0xff]
    %v70 = vld [vmem:[%s1 + $0x48] sm:$0xff]
    %v71 = vld [vmem:[%s1 + $0x50] sm:$0xff]
    %v72 = vld [vmem:[%s1 + $0x58] sm:$0xff]
    %v73 = vld [vmem:[%s1 + $0x60] sm:$0xff]
    %v74 = vld [vmem:[%s1 + $0x68] sm:$0xff]
    %v75 = vld [vmem:[%s1 + $0x70] sm:$0xff]
    %v76 = vld [vmem:[%s1 + $0x78] sm:$0xff]
    %v77 = vld [vmem:[%s1 + $0x80] sm:$0xff]
    %v78 = vld [vmem:[%s1 + $0x88] sm:$0xff]
    %v79 = vld [vmem:[%s1 + $0x90] sm:$0xff]
    %v80 = vld [vmem:[%s1 + $0x98] sm:$0xff]
    %v81 = vld [vmem:[%s1 + $0xa0] sm:$0xff]
    %v82 = vld [vmem:[%s1 + $0xa8] sm:$0xff]
    %v83 = vld [vmem:[%s1 + $0xb0] sm:$0xff]
    %v84 = vld [vmem:[%s1 + $0xb8] sm:$0xff]
    %v85 = vld [vmem:[%s1 + $0xc0] sm:$0xff]
    %v86 = vld [vmem:[%s1 + $0xc8] sm:$0xff]
    %v87 = vld [vmem:[%s1 + $0xd0] sm:$0xff]
    %v88 = vld [vmem:[%s1 + $0xd8] sm:$0xff]
    %v89 = vld [vmem:[%s1 + $0xe0] sm:$0xff]
    %v90 = vld [vmem:[%s1 + $0xe8] sm:$0xff]
    %v91 = vld [vmem:[%s1 + $0xf0] sm:$0xff]
    %v92 = vld [vmem:[%s1 + $0xf8] sm:$0xff]
    %v93 = vld [vmem:[#allocation2] sm:$0xff]
    %v94 = vld [vmem:[#allocation2 + $0x8] sm:$0xff]
    %v95 = vld [vmem:[#allocation2 + $0x10] sm:$0xff]
    %v96 = vld [vmem:[#allocation2 + $0x18] sm:$0xff]
    %v97 = vld [vmem:[#allocation2 + $0x20] sm:$0xff]
    %v98 = vld [vmem:[#allocation2 + $0x28] sm:$0xff]
    %v99 = vld [vmem:[#allocation2 + $0x30] sm:$0xff]
    %v100 = vld [vmem:[#allocation2 + $0x38] sm:$0xff]
    %v101 = vld [vmem:[#allocation2 + $0x40] sm:$0xff]
    %v102 = vld [vmem:[#allocation2 + $0x48] sm:$0xff]
    %v103 = vld [vmem:[#allocation2 + $0x50] sm:$0xff]
    %v104 = vld [vmem:[#allocation2 + $0x58] sm:$0xff]
    %v105 = vld [vmem:[#allocation2 + $0x60] sm:$0xff]
    %v106 = vld [vmem:[#allocation2 + $0x68] sm:$0xff]
    %v107 = vld [vmem:[#allocation2 + $0x70] sm:$0xff]
    %v108 = vld [vmem:[#allocation2 + $0x78] sm:$0xff]
    %v109 = vld [vmem:[#allocation2 + $0x80] sm:$0xff]
    %v110 = vld [vmem:[#allocation2 + $0x88] sm:$0xff]
    %v111 = vld [vmem:[#allocation2 + $0x90] sm:$0xff]
    %v112 = vld [vmem:[#allocation2 + $0x98] sm:$0xff]
    %v113 = vld [vmem:[#allocation2 + $0xa0] sm:$0xff]
    %v114 = vld [vmem:[#allocation2 + $0xa8] sm:$0xff]
    %v115 = vld [vmem:[#allocation2 + $0xb0] sm:$0xff]
    %v116 = vld [vmem:[#allocation2 + $0xb8] sm:$0xff]
    %v117 = vld [vmem:[#allocation2 + $0xc0] sm:$0xff]
    %v118 = vld [vmem:[#allocation2 + $0xc8] sm:$0xff]
    %v119 = vld [vmem:[#allocation2 + $0xd0] sm:$0xff]
    %v120 = vld [vmem:[#allocation2 + $0xd8] sm:$0xff]
    %v121 = vld [vmem:[#allocation2 + $0xe0] sm:$0xff]
    %v122 = vld [vmem:[#allocation2 + $0xe8] sm:$0xff]
    %v123 = vld [vmem:[#allocation2 + $0xf0] sm:$0xff]
    %v124 = vld [vmem:[#allocation2 + $0xf8] sm:$0xff]
    %v125 = vld [vmem:[#allocation2 + $0x100] sm:$0xff]
    %v126 = vld [vmem:[#allocation2 + $0x108] sm:$0xff]
    %v127 = vld [vmem:[#allocation2 + $0x110] sm:$0xff]
    %v128 = vld [vmem:[#allocation2 + $0x118] sm:$0xff]
    %v129 = vld [vmem:[#allocation2 + $0x120] sm:$0xff]
    %v130 = vld [vmem:[#allocation2 + $0x128] sm:$0xff]
    %v131 = vld [vmem:[#allocation2 + $0x130] sm:$0xff]
    %v132 = vld [vmem:[#allocation2 + $0x138] sm:$0xff]
    %v133 = vld [vmem:[#allocation2 + $0x140] sm:$0xff]
    %v134 = vld [vmem:[#allocation2 + $0x148] sm:$0xff]
    %v135 = vld [vmem:[#allocation2 + $0x150] sm:$0xff]
    %v136 = vld [vmem:[#allocation2 + $0x158] sm:$0xff]
    %v137 = vld [vmem:[#allocation2 + $0x160] sm:$0xff]
    %v138 = vld [vmem:[#allocation2 + $0x168] sm:$0xff]
    %v139 = vld [vmem:[#allocation2 + $0x170] sm:$0xff]
    %v140 = vld [vmem:[#allocation2 + $0x178] sm:$0xff]
    %v141 = vld [vmem:[#allocation2 + $0x180] sm:$0xff]
    %v142 = vld [vmem:[#allocation2 + $0x188] sm:$0xff]
    %v143 = vld [vmem:[#allocation2 + $0x190] sm:$0xff]
    %v144 = vld [vmem:[#allocation2 + $0x198] sm:$0xff]
    %v145 = vld [vmem:[#allocation2 + $0x1a0] sm:$0xff]
    %v146 = vld [vmem:[#allocation2 + $0x1a8] sm:$0xff]
    %v147 = vld [vmem:[#allocation2 + $0x1b0] sm:$0xff]
    %v148 = vld [vmem:[#allocation2 + $0x1b8] sm:$0xff]
    %v149 = vld [vmem:[#allocation2 + $0x1c0] sm:$0xff]
    %v150 = vld [vmem:[#allocation2 + $0x1c8] sm:$0xff]
    %v151 = vld [vmem:[#allocation2 + $0x1d0] sm:$0xff]
    %v152 = vld [vmem:[#allocation2 + $0x1d8] sm:$0xff]
    %v153 = vld [vmem:[#allocation2 + $0x1e0] sm:$0xff]
    %v154 = vld [vmem:[#allocation2 + $0x1e8] sm:$0xff]
    %v155 = vld [vmem:[#allocation2 + $0x1f0] sm:$0xff]
    %v156 = vld [vmem:[#allocation2 + $0x1f8] sm:$0xff]
    %v157 = vadd.f32 %v93, %v94
    %158 = vadd.xlane.f32.xlu0 %v157
    %v159 = vpop.xlane.xlu0 %158
    %v160 = vadd.f32 %v95, %v96
    %161 = vadd.xlane.f32.xlu0 %v160
    %v162 = vpop.xlane.xlu0 %161
    %v163 = vadd.f32 %v97, %v98
    %164 = vadd.xlane.f32.xlu0 %v163
    %v165 = vpop.xlane.xlu0 %164
    %v166 = vadd.f32 %v99, %v100
    %167 = vadd.xlane.f32.xlu0 %v166
    %v168 = vpop.xlane.xlu0 %167
    %v169 = vadd.f32 %v101, %v102
    %170 = vadd.xlane.f32.xlu0 %v169
    %v171 = vpop.xlane.xlu0 %170
    %v172 = vadd.f32 %v103, %v104
    %173 = vadd.xlane.f32.xlu0 %v172
    %v174 = vpop.xlane.xlu0 %173
    %v175 = vadd.f32 %v105, %v106
    %176 = vadd.xlane.f32.xlu0 %v175
    %v177 = vpop.xlane.xlu0 %176
    %v178 = vadd.f32 %v107, %v108
    %179 = vadd.xlane.f32.xlu0 %v178
    %v180 = vpop.xlane.xlu0 %179
    %v181 = vadd.f32 %v109, %v110
    %182 = vadd.xlane.f32.xlu0 %v181
    %v183 = vpop.xlane.xlu0 %182
    %v184 = vadd.f32 %v111, %v112
    %185 = vadd.xlane.f32.xlu0 %v184
    %v186 = vpop.xlane.xlu0 %185
    %v187 = vadd.f32 %v113, %v114
    %188 = vadd.xlane.f32.xlu0 %v187
    %v189 = vpop.xlane.xlu0 %188
    %v190 = vadd.f32 %v115, %v116
    %191 = vadd.xlane.f32.xlu0 %v190
    %v192 = vpop.xlane.xlu0 %191
    %v193 = vadd.f32 %v117, %v118
    %194 = vadd.xlane.f32.xlu0 %v193
    %v195 = vpop.xlane.xlu0 %194
    %v196 = vadd.f32 %v119, %v120
    %197 = vadd.xlane.f32.xlu0 %v196
    %v198 = vpop.xlane.xlu0 %197
    %v199 = vadd.f32 %v121, %v122
    %200 = vadd.xlane.f32.xlu0 %v199
    %v201 = vpop.xlane.xlu0 %200
    %v202 = vadd.f32 %v123, %v124
    %203 = vadd.xlane.f32.xlu0 %v202
    %v204 = vpop.xlane.xlu0 %203
    %v205 = vadd.f32 %v125, %v126
    %206 = vadd.xlane.f32.xlu0 %v205
    %v207 = vpop.xlane.xlu0 %206
    %v208 = vadd.f32 %v127, %v128
    %209 = vadd.xlane.f32.xlu0 %v208
    %v210 = vpop.xlane.xlu0 %209
    %v211 = vadd.f32 %v129, %v130
    %212 = vadd.xlane.f32.xlu0 %v211
    %v213 = vpop.xlane.xlu0 %212
    %v214 = vadd.f32 %v131, %v132
    %215 = vadd.xlane.f32.xlu0 %v214
    %v216 = vpop.xlane.xlu0 %215
    %v217 = vadd.f32 %v133, %v134
    %218 = vadd.xlane.f32.xlu0 %v217
    %v219 = vpop.xlane.xlu0 %218
    %v220 = vadd.f32 %v135, %v136
    %221 = vadd.xlane.f32.xlu0 %v220
    %v222 = vpop.xlane.xlu0 %221
    %v223 = vadd.f32 %v137, %v138
    %224 = vadd.xlane.f32.xlu0 %v223
    %v225 = vpop.xlane.xlu0 %224
    %v226 = vadd.f32 %v139, %v140
    %227 = vadd.xlane.f32.xlu0 %v226
    %v228 = vpop.xlane.xlu0 %227
    %v229 = vadd.f32 %v141, %v142
    %230 = vadd.xlane.f32.xlu0 %v229
    %v231 = vpop.xlane.xlu0 %230
    %v232 = vadd.f32 %v143, %v144
    %233 = vadd.xlane.f32.xlu0 %v232
    %v234 = vpop.xlane.xlu0 %233
    %v235 = vadd.f32 %v145, %v146
    %236 = vadd.xlane.f32.xlu0 %v235
    %v237 = vpop.xlane.xlu0 %236
    %v238 = vadd.f32 %v147, %v148
    %239 = vadd.xlane.f32.xlu0 %v238
    %v240 = vpop.xlane.xlu0 %239
    %v241 = vadd.f32 %v149, %v150
    %242 = vadd.xlane.f32.xlu0 %v241
    %v243 = vpop.xlane.xlu0 %242
    %v244 = vadd.f32 %v151, %v152
    %245 = vadd.xlane.f32.xlu0 %v244
    %v246 = vpop.xlane.xlu0 %245
    %v247 = vadd.f32 %v153, %v154
    %248 = vadd.xlane.f32.xlu0 %v247
    %v249 = vpop.xlane.xlu0 %248
    %v250 = vadd.f32 %v155, %v156
    %251 = vadd.xlane.f32.xlu0 %v250
    %v252 = vpop.xlane.xlu0 %251
    %v253 = vadd.f32 %v61, %v159
    %v254 = vadd.f32 %v62, %v162
    %v255 = vadd.f32 %v63, %v165
    %v256 = vadd.f32 %v64, %v168
    %v257 = vadd.f32 %v65, %v171
    %v258 = vadd.f32 %v66, %v174
    %v259 = vadd.f32 %v67, %v177
    %v260 = vadd.f32 %v68, %v180
    %v261 = vadd.f32 %v69, %v183
    %v262 = vadd.f32 %v70, %v186
    %v263 = vadd.f32 %v71, %v189
    %v264 = vadd.f32 %v72, %v192
    %v265 = vadd.f32 %v73, %v195
    %v266 = vadd.f32 %v74, %v198
    %v267 = vadd.f32 %v75, %v201
    %v268 = vadd.f32 %v76, %v204
    %v269 = vadd.f32 %v77, %v207
    %v270 = vadd.f32 %v78, %v210
    %v271 = vadd.f32 %v79, %v213
    %v272 = vadd.f32 %v80, %v216
    %v273 = vadd.f32 %v81, %v219
    %v274 = vadd.f32 %v82, %v222
    %v275 = vadd.f32 %v83, %v225
    %v276 = vadd.f32 %v84, %v228
    %v277 = vadd.f32 %v85, %v231
    %v278 = vadd.f32 %v86, %v234
    %v279 = vadd.f32 %v87, %v237
    %v280 = vadd.f32 %v88, %v240
    %v281 = vadd.f32 %v89, %v243
    %v282 = vadd.f32 %v90, %v246
    %v283 = vadd.f32 %v91, %v249
    %v284 = vadd.f32 %v92, %v252
    %vm285 = vcmask 7168
    %286 = vst.msk [vmem:[%s1] sm:$0xff] %vm285, %v253
    %287 = vst.msk [vmem:[%s1 + $0x8] sm:$0xff] %vm285, %v254
    %288 = vst.msk [vmem:[%s1 + $0x10] sm:$0xff] %vm285, %v255
    %289 = vst.msk [vmem:[%s1 + $0x18] sm:$0xff] %vm285, %v256
    %290 = vst.msk [vmem:[%s1 + $0x20] sm:$0xff] %vm285, %v257
    %291 = vst.msk [vmem:[%s1 + $0x28] sm:$0xff] %vm285, %v258
    %292 = vst.msk [vmem:[%s1 + $0x30] sm:$0xff] %vm285, %v259
    %293 = vst.msk [vmem:[%s1 + $0x38] sm:$0xff] %vm285, %v260
    %294 = vst.msk [vmem:[%s1 + $0x40] sm:$0xff] %vm285, %v261
    %295 = vst.msk [vmem:[%s1 + $0x48] sm:$0xff] %vm285, %v262
    %296 = vst.msk [vmem:[%s1 + $0x50] sm:$0xff] %vm285, %v263
    %297 = vst.msk [vmem:[%s1 + $0x58] sm:$0xff] %vm285, %v264
    %298 = vst.msk [vmem:[%s1 + $0x60] sm:$0xff] %vm285, %v265
    %299 = vst.msk [vmem:[%s1 + $0x68] sm:$0xff] %vm285, %v266
    %300 = vst.msk [vmem:[%s1 + $0x70] sm:$0xff] %vm285, %v267
    %301 = vst.msk [vmem:[%s1 + $0x78] sm:$0xff] %vm285, %v268
    %302 = vst.msk [vmem:[%s1 + $0x80] sm:$0xff] %vm285, %v269
    %303 = vst.msk [vmem:[%s1 + $0x88] sm:$0xff] %vm285, %v270
    %304 = vst.msk [vmem:[%s1 + $0x90] sm:$0xff] %vm285, %v271
    %305 = vst.msk [vmem:[%s1 + $0x98] sm:$0xff] %vm285, %v272
    %306 = vst.msk [vmem:[%s1 + $0xa0] sm:$0xff] %vm285, %v273
    %307 = vst.msk [vmem:[%s1 + $0xa8] sm:$0xff] %vm285, %v274
    %308 = vst.msk [vmem:[%s1 + $0xb0] sm:$0xff] %vm285, %v275
    %309 = vst.msk [vmem:[%s1 + $0xb8] sm:$0xff] %vm285, %v276
    %310 = vst.msk [vmem:[%s1 + $0xc0] sm:$0xff] %vm285, %v277
    %311 = vst.msk [vmem:[%s1 + $0xc8] sm:$0xff] %vm285, %v278
    %312 = vst.msk [vmem:[%s1 + $0xd0] sm:$0xff] %vm285, %v279
    %313 = vst.msk [vmem:[%s1 + $0xd8] sm:$0xff] %vm285, %v280
    %314 = vst.msk [vmem:[%s1 + $0xe0] sm:$0xff] %vm285, %v281
    %315 = vst.msk [vmem:[%s1 + $0xe8] sm:$0xff] %vm285, %v282
    %316 = vst.msk [vmem:[%s1 + $0xf0] sm:$0xff] %vm285, %v283
    %317 = vst.msk [vmem:[%s1 + $0xf8] sm:$0xff] %vm285, %v284
    // Predicated region
    $region14: #{tpu_custom_call.1} parent=1 // pred_check
      %p318 = pneg %p24
    $region15: #{tpu_custom_call.1} parent=1 // pred_check_branch
      %320 = sbr.rel (%p318) target = $region17
    $region16: #{tpu_custom_call.1} parent=1 // pred_region
      %v321 = vld [vmem:[%s1] sm:$0xff]
      %v322 = vld [vmem:[%s1 + $0x8] sm:$0xff]
      %v323 = vld [vmem:[%s1 + $0x10] sm:$0xff]
      %v324 = vld [vmem:[%s1 + $0x18] sm:$0xff]
      %v325 = vld [vmem:[%s1 + $0x20] sm:$0xff]
      %v326 = vld [vmem:[%s1 + $0x28] sm:$0xff]
      %v327 = vld [vmem:[%s1 + $0x30] sm:$0xff]
      %v328 = vld [vmem:[%s1 + $0x38] sm:$0xff]
      %v329 = vld [vmem:[%s1 + $0x40] sm:$0xff]
      %v330 = vld [vmem:[%s1 + $0x48] sm:$0xff]
      %v331 = vld [vmem:[%s1 + $0x50] sm:$0xff]
      %v332 = vld [vmem:[%s1 + $0x58] sm:$0xff]
      %v333 = vld [vmem:[%s1 + $0x60] sm:$0xff]
      %v334 = vld [vmem:[%s1 + $0x68] sm:$0xff]
      %v335 = vld [vmem:[%s1 + $0x70] sm:$0xff]
      %v336 = vld [vmem:[%s1 + $0x78] sm:$0xff]
      %v337 = vld [vmem:[%s1 + $0x80] sm:$0xff]
      %v338 = vld [vmem:[%s1 + $0x88] sm:$0xff]
      %v339 = vld [vmem:[%s1 + $0x90] sm:$0xff]
      %v340 = vld [vmem:[%s1 + $0x98] sm:$0xff]
      %v341 = vld [vmem:[%s1 + $0xa0] sm:$0xff]
      %v342 = vld [vmem:[%s1 + $0xa8] sm:$0xff]
      %v343 = vld [vmem:[%s1 + $0xb0] sm:$0xff]
      %v344 = vld [vmem:[%s1 + $0xb8] sm:$0xff]
      %v345 = vld [vmem:[%s1 + $0xc0] sm:$0xff]
      %v346 = vld [vmem:[%s1 + $0xc8] sm:$0xff]
      %v347 = vld [vmem:[%s1 + $0xd0] sm:$0xff]
      %v348 = vld [vmem:[%s1 + $0xd8] sm:$0xff]
      %v349 = vld [vmem:[%s1 + $0xe0] sm:$0xff]
      %v350 = vld [vmem:[%s1 + $0xe8] sm:$0xff]
      %v351 = vld [vmem:[%s1 + $0xf0] sm:$0xff]
      %v352 = vld [vmem:[%s1 + $0xf8] sm:$0xff]
      %v353 = vadd.f32 %v321, 1.0
      %v354 = vadd.f32 %v322, 1.0
      %v355 = vadd.f32 %v323, 1.0
      %v356 = vadd.f32 %v324, 1.0
      %v357 = vadd.f32 %v325, 1.0
      %v358 = vadd.f32 %v326, 1.0
      %v359 = vadd.f32 %v327, 1.0
      %v360 = vadd.f32 %v328, 1.0
      %v361 = vadd.f32 %v329, 1.0
      %v362 = vadd.f32 %v330, 1.0
      %v363 = vadd.f32 %v331, 1.0
      %v364 = vadd.f32 %v332, 1.0
      %v365 = vadd.f32 %v333, 1.0
      %v366 = vadd.f32 %v334, 1.0
      %v367 = vadd.f32 %v335, 1.0
      %v368 = vadd.f32 %v336, 1.0
      %v369 = vadd.f32 %v337, 1.0
      %v370 = vadd.f32 %v338, 1.0
      %v371 = vadd.f32 %v339, 1.0
      %v372 = vadd.f32 %v340, 1.0
      %v373 = vadd.f32 %v341, 1.0
      %v374 = vadd.f32 %v342, 1.0
      %v375 = vadd.f32 %v343, 1.0
      %v376 = vadd.f32 %v344, 1.0
      %v377 = vadd.f32 %v345, 1.0
      %v378 = vadd.f32 %v346, 1.0
      %v379 = vadd.f32 %v347, 1.0
      %v380 = vadd.f32 %v348, 1.0
      %v381 = vadd.f32 %v349, 1.0
      %v382 = vadd.f32 %v350, 1.0
      %v383 = vadd.f32 %v351, 1.0
      %v384 = vadd.f32 %v352, 1.0
      %v385 = vrsqrt.pop %v353
      %v386 = vrsqrt.pop %v354
      %v387 = vrsqrt.pop %v355
      %v388 = vrsqrt.pop %v356
      %v389 = vrsqrt.pop %v357
      %v390 = vrsqrt.pop %v358
      %v391 = vrsqrt.pop %v359
      %v392 = vrsqrt.pop %v360
      %v393 = vrsqrt.pop %v361
      %v394 = vrsqrt.pop %v362
      %v395 = vrsqrt.pop %v363
      %v396 = vrsqrt.pop %v364
      %v397 = vrsqrt.pop %v365
      %v398 = vrsqrt.pop %v366
      %v399 = vrsqrt.pop %v367
      %v400 = vrsqrt.pop %v368
      %v401 = vrsqrt.pop %v369
      %v402 = vrsqrt.pop %v370
      %v403 = vrsqrt.pop %v371
      %v404 = vrsqrt.pop %v372
      %v405 = vrsqrt.pop %v373
      %v406 = vrsqrt.pop %v374
      %v407 = vrsqrt.pop %v375
      %v408 = vrsqrt.pop %v376
      %v409 = vrsqrt.pop %v377
      %v410 = vrsqrt.pop %v378
      %v411 = vrsqrt.pop %v379
      %v412 = vrsqrt.pop %v380
      %v413 = vrsqrt.pop %v381
      %v414 = vrsqrt.pop %v382
      %v415 = vrsqrt.pop %v383
      %v416 = vrsqrt.pop %v384
      %417 = vst.msk [vmem:[%s1] sm:$0xff] %vm285, %v385
      %418 = vst.msk [vmem:[%s1 + $0x8] sm:$0xff] %vm285, %v386
      %419 = vst.msk [vmem:[%s1 + $0x10] sm:$0xff] %vm285, %v387
      %420 = vst.msk [vmem:[%s1 + $0x18] sm:$0xff] %vm285, %v388
      %421 = vst.msk [vmem:[%s1 + $0x20] sm:$0xff] %vm285, %v389
      %422 = vst.msk [vmem:[%s1 + $0x28] sm:$0xff] %vm285, %v390
      %423 = vst.msk [vmem:[%s1 + $0x30] sm:$0xff] %vm285, %v391
      %424 = vst.msk [vmem:[%s1 + $0x38] sm:$0xff] %vm285, %v392
      %425 = vst.msk [vmem:[%s1 + $0x40] sm:$0xff] %vm285, %v393
      %426 = vst.msk [vmem:[%s1 + $0x48] sm:$0xff] %vm285, %v394
      %427 = vst.msk [vmem:[%s1 + $0x50] sm:$0xff] %vm285, %v395
      %428 = vst.msk [vmem:[%s1 + $0x58] sm:$0xff] %vm285, %v396
      %429 = vst.msk [vmem:[%s1 + $0x60] sm:$0xff] %vm285, %v397
      %430 = vst.msk [vmem:[%s1 + $0x68] sm:$0xff] %vm285, %v398
      %431 = vst.msk [vmem:[%s1 + $0x70] sm:$0xff] %vm285, %v399
      %432 = vst.msk [vmem:[%s1 + $0x78] sm:$0xff] %vm285, %v400
      %433 = vst.msk [vmem:[%s1 + $0x80] sm:$0xff] %vm285, %v401
      %434 = vst.msk [vmem:[%s1 + $0x88] sm:$0xff] %vm285, %v402
      %435 = vst.msk [vmem:[%s1 + $0x90] sm:$0xff] %vm285, %v403
      %436 = vst.msk [vmem:[%s1 + $0x98] sm:$0xff] %vm285, %v404
      %437 = vst.msk [vmem:[%s1 + $0xa0] sm:$0xff] %vm285, %v405
      %438 = vst.msk [vmem:[%s1 + $0xa8] sm:$0xff] %vm285, %v406
      %439 = vst.msk [vmem:[%s1 + $0xb0] sm:$0xff] %vm285, %v407
      %440 = vst.msk [vmem:[%s1 + $0xb8] sm:$0xff] %vm285, %v408
      %441 = vst.msk [vmem:[%s1 + $0xc0] sm:$0xff] %vm285, %v409
      %442 = vst.msk [vmem:[%s1 + $0xc8] sm:$0xff] %vm285, %v410
      %443 = vst.msk [vmem:[%s1 + $0xd0] sm:$0xff] %vm285, %v411
      %444 = vst.msk [vmem:[%s1 + $0xd8] sm:$0xff] %vm285, %v412
      %445 = vst.msk [vmem:[%s1 + $0xe0] sm:$0xff] %vm285, %v413
      %446 = vst.msk [vmem:[%s1 + $0xe8] sm:$0xff] %vm285, %v414
      %447 = vst.msk [vmem:[%s1 + $0xf0] sm:$0xff] %vm285, %v415
      %448 = vst.msk [vmem:[%s1 + $0xf8] sm:$0xff] %vm285, %v416
      %v449 = vadd.f32 %v385, 1.0
      %v450 = vadd.f32 %v386, 1.0
      %v451 = vadd.f32 %v387, 1.0
      %v452 = vadd.f32 %v388, 1.0
      %v453 = vadd.f32 %v389, 1.0
      %v454 = vadd.f32 %v390, 1.0
      %v455 = vadd.f32 %v391, 1.0
      %v456 = vadd.f32 %v392, 1.0
      %v457 = vadd.f32 %v393, 1.0
      %v458 = vadd.f32 %v394, 1.0
      %v459 = vadd.f32 %v395, 1.0
      %v460 = vadd.f32 %v396, 1.0
      %v461 = vadd.f32 %v397, 1.0
      %v462 = vadd.f32 %v398, 1.0
      %v463 = vadd.f32 %v399, 1.0
      %v464 = vadd.f32 %v400, 1.0
      %v465 = vadd.f32 %v401, 1.0
      %v466 = vadd.f32 %v402, 1.0
      %v467 = vadd.f32 %v403, 1.0
      %v468 = vadd.f32 %v404, 1.0
      %v469 = vadd.f32 %v405, 1.0
      %v470 = vadd.f32 %v406, 1.0
      %v471 = vadd.f32 %v407, 1.0
      %v472 = vadd.f32 %v408, 1.0
      %v473 = vadd.f32 %v409, 1.0
      %v474 = vadd.f32 %v410, 1.0
      %v475 = vadd.f32 %v411, 1.0
      %v476 = vadd.f32 %v412, 1.0
      %v477 = vadd.f32 %v413, 1.0
      %v478 = vadd.f32 %v414, 1.0
      %v479 = vadd.f32 %v415, 1.0
      %v480 = vadd.f32 %v416, 1.0
      %481 = vst.msk [vmem:[%s2] sm:$0xff] %vm285, %v449
      %482 = vst.msk [vmem:[%s2 + $0x8] sm:$0xff] %vm285, %v450
      %483 = vst.msk [vmem:[%s2 + $0x10] sm:$0xff] %vm285, %v451
      %484 = vst.msk [vmem:[%s2 + $0x18] sm:$0xff] %vm285, %v452
      %485 = vst.msk [vmem:[%s2 + $0x20] sm:$0xff] %vm285, %v453
      %486 = vst.msk [vmem:[%s2 + $0x28] sm:$0xff] %vm285, %v454
      %487 = vst.msk [vmem:[%s2 + $0x30] sm:$0xff] %vm285, %v455
      %488 = vst.msk [vmem:[%s2 + $0x38] sm:$0xff] %vm285, %v456
      %489 = vst.msk [vmem:[%s2 + $0x40] sm:$0xff] %vm285, %v457
      %490 = vst.msk [vmem:[%s2 + $0x48] sm:$0xff] %vm285, %v458
      %491 = vst.msk [vmem:[%s2 + $0x50] sm:$0xff] %vm285, %v459
      %492 = vst.msk [vmem:[%s2 + $0x58] sm:$0xff] %vm285, %v460
      %493 = vst.msk [vmem:[%s2 + $0x60] sm:$0xff] %vm285, %v461
      %494 = vst.msk [vmem:[%s2 + $0x68] sm:$0xff] %vm285, %v462
      %495 = vst.msk [vmem:[%s2 + $0x70] sm:$0xff] %vm285, %v463
      %496 = vst.msk [vmem:[%s2 + $0x78] sm:$0xff] %vm285, %v464
      %497 = vst.msk [vmem:[%s2 + $0x80] sm:$0xff] %vm285, %v465
      %498 = vst.msk [vmem:[%s2 + $0x88] sm:$0xff] %vm285, %v466
      %499 = vst.msk [vmem:[%s2 + $0x90] sm:$0xff] %vm285, %v467
      %500 = vst.msk [vmem:[%s2 + $0x98] sm:$0xff] %vm285, %v468
      %501 = vst.msk [vmem:[%s2 + $0xa0] sm:$0xff] %vm285, %v469
      %502 = vst.msk [vmem:[%s2 + $0xa8] sm:$0xff] %vm285, %v470
      %503 = vst.msk [vmem:[%s2 + $0xb0] sm:$0xff] %vm285, %v471
      %504 = vst.msk [vmem:[%s2 + $0xb8] sm:$0xff] %vm285, %v472
      %505 = vst.msk [vmem:[%s2 + $0xc0] sm:$0xff] %vm285, %v473
      %506 = vst.msk [vmem:[%s2 + $0xc8] sm:$0xff] %vm285, %v474
      %507 = vst.msk [vmem:[%s2 + $0xd0] sm:$0xff] %vm285, %v475
      %508 = vst.msk [vmem:[%s2 + $0xd8] sm:$0xff] %vm285, %v476
      %509 = vst.msk [vmem:[%s2 + $0xe0] sm:$0xff] %vm285, %v477
      %510 = vst.msk [vmem:[%s2 + $0xe8] sm:$0xff] %vm285, %v478
      %511 = vst.msk [vmem:[%s2 + $0xf0] sm:$0xff] %vm285, %v479
      %512 = vst.msk [vmem:[%s2 + $0xf8] sm:$0xff] %vm285, %v480
    $region17: #{tpu_custom_call.1} parent=1 // pred_fallthru
      _
    // Predicated region
    $region18: #{tpu_custom_call.1} parent=1 // pred_check
      _
    $region19: #{tpu_custom_call.1} parent=1 // pred_check_branch
      %514 = sbr.rel (0) target = $region21
    $region20: #{tpu_custom_call.1} parent=1 // pred_region
      _
    $region21: #{tpu_custom_call.1} parent=1 // pred_fallthru
      _
    // Predicated region
    $region22: #{tpu_custom_call.1} parent=1 // pred_check
      _
    $region23: #{tpu_custom_call.1} parent=1 // pred_check_branch
      %516 = sbr.rel (0) target = $region25
    $region24: #{tpu_custom_call.1} parent=1 // pred_region
      _
    $region25: #{tpu_custom_call.1} parent=1 // pred_fallthru
      _
    // Predicated region
    $region26: #{tpu_custom_call.1} parent=1 // pred_check
      _
    $region27: #{tpu_custom_call.1} parent=1 // pred_check_branch
      %518 = sbr.rel (0) target = $region29
    $region28: #{tpu_custom_call.1} parent=1 // pred_region
      _
    $region29: #{tpu_custom_call.1} parent=1 // pred_fallthru
      _
    // Predicated region
    $region30: #{tpu_custom_call.1} parent=1 // pred_check
      _
    $region31: #{tpu_custom_call.1} parent=1 // pred_check_branch
      %520 = sbr.rel (0) target = $region33
    $region32: #{tpu_custom_call.1} parent=1 // pred_region
      _
    $region33: #{tpu_custom_call.1} parent=1 // pred_fallthru
      _
    %521 = vsyncpa [#allocation3], 1

</llo_original>
